<compile_context>
chip_gen: v6e
topology: v6e:2x2x1
jax: 0.10.0
libtpu: 0.0.40
codegen_flags: <defaults>
</compile_context>

<pallas_src>
import functools
import math

import jax
import jax.numpy as jnp
import numpy as np
from jax.experimental import pallas as pl
from jax.experimental.pallas import tpu as pltpu

_LOG_2PI = math.log(2.0 * math.pi)


def _nf_radial_stack_kernel(x_ref, x0_ref, params_ref, z_ref, out_ref, *,
                            n_dim, num_flows, groups):
    """Fused K-layer radial-flow forward + standard-MVN prior log-prob.

    x_ref      : (md, 128) f32 VMEM — lane-dense view of the (m, n) particles
    x0_ref     : (K, 128)  f32 VMEM — per-flow x0, tiled to 128 lanes
    params_ref : (2, K)    f32 VMEM — row 0: log_alpha, row 1: beta
    z_ref      : (md, 128) f32 VMEM — last-flow output (lane-dense)
    out_ref    : (md, 128) f32 VMEM — cols [0, groups): per-row prior log-prob;
                                      cols >= groups: the scalar sum of log-dets
    """
    x = x_ref[...]                                    # (md, 128) full vregs

    # Batched per-flow parameter math: one vectorized pass over (1, K) values,
    # fully off the per-flow reduce->sqrt->divide chain.
    la = params_ref[0:1, :]                           # (1, K) log_alpha
    be = params_ref[1:2, :]                           # (1, K) beta
    exp_alpha = jnp.exp(la)                           # (1, K)
    # Numerically stable softplus (never overflows for large beta).
    softplus_b = jnp.maximum(be, 0.0) + jnp.log(1.0 + jnp.exp(-jnp.abs(be)))
    beta_eff = softplus_b - exp_alpha                 # (1, K)

    # Flow loop (K is small and static -> unrolled).  NOTE: matching the
    # reference forward(), every flow sees the ORIGINAL x; only the last flow's
    # output becomes z, and all log-dets are evaluated at the original x.
    prod_a = jnp.ones((1, 1), jnp.float32)
    prod_b = jnp.ones((1, 1), jnp.float32)
    z = x
    for k in range(num_flows):
        x0 = x0_ref[k:k + 1, :]                       # (1, 128) sublane row
        diff = x - x0                                 # (md, 128)
        # Global Frobenius norm over the whole (m, n) batch: torch.norm(x - x0).
        r = jnp.sqrt(jnp.sum(diff * diff, keepdims=True))        # (1, 1)
        ea_k = exp_alpha[0:1, k:k + 1]                # (1, 1)
        bf_k = beta_eff[0:1, k:k + 1]                 # (1, 1)
        h = 1.0 / (ea_k + r)                          # (1, 1)
        bh = bf_k * h                                 # (1, 1)
        # Deferred log-det logs: accumulate the two log arguments as products,
        # take 2 logs total after the loop (h-reuse: beta*r/(a+r)^2 == beta*r*h*h).
        prod_a = prod_a * (1.0 + bh)
        prod_b = prod_b * (1.0 + bh - bf_k * r * h * h)
        if k == num_flows - 1:
            z = x + bh * diff                         # elementwise hot path (VPU)

    z_ref[...] = z                                    # unmasked lane-dense stores

    ld_total = (n_dim - 1) * jnp.log(prod_a) + jnp.log(prod_b)    # (1, 1)

    # Per-original-row sum of squares via one small MXU matmul against a 0/1
    # selection matrix built in-kernel from iotas (no HBM input):
    # sel[l, c] = 1 iff lane l belongs to original-row group c.
    row = jax.lax.broadcasted_iota(jnp.int32, (128, 128), 0)
    col = jax.lax.broadcasted_iota(jnp.int32, (128, 128), 1)
    lin = row - col * n_dim
    sel = jnp.logical_and(lin >= 0, lin < n_dim).astype(jnp.float32)

    ssq = jnp.dot(z * z, sel, preferred_element_type=jnp.float32)  # (md, 128)
    plp = -0.5 * (n_dim * _LOG_2PI + ssq)

    # Pack the scalar log_det into the unused lanes (cols >= groups) of the plp
    # block: one fused, unmasked store; no separate (1,1) output / DMA descriptor.
    lane = jax.lax.broadcasted_iota(jnp.int32, plp.shape, 1)
    out_ref[...] = jnp.where(lane < groups, plp, ld_total)


def prepare_flow_params(x0_stack, log_alpha_stack, beta_stack, n):
    """Step-invariant prep (hoist out of the per-time-step path): tile each x0
    to 128 lanes and pack the per-flow scalars into one tiny (2, K) array."""
    assert 128 % n == 0, "lane-dense path needs 128 % n == 0"
    groups = 128 // n
    x0_dense = jnp.tile(x0_stack.astype(jnp.float32), (1, groups))   # (K, 128)
    params = jnp.stack([log_alpha_stack.astype(jnp.float32),
                        beta_stack.astype(jnp.float32)])             # (2, K)
    return x0_dense, params


@jax.jit
def _flow_forward_dense(x, x0_dense, params):
    """Dense (lane-packed) forward given prepared flow parameters."""
    m, n = x.shape
    num_flows = x0_dense.shape[0]
    assert (m * n) % 128 == 0 and 128 % n == 0, (
        "lane-dense path needs m*n % 128 == 0 and 128 % n == 0")
    groups = 128 // n
    assert groups < 128, "need n >= 2 to pack log_det into unused lanes"
    # TODO(synk): add a padded fallback path for dims that don't divide 128.
    md = (m * n) // 128

    x_dense = x.reshape(md, 128).astype(jnp.float32)

    kernel = functools.partial(_nf_radial_stack_kernel, n_dim=n,
                               num_flows=num_flows, groups=groups)

    z_dense, packed = pl.pallas_call(
        kernel,
        out_shape=(
            jax.ShapeDtypeStruct((md, 128), jnp.float32),   # z (lane-dense)
            jax.ShapeDtypeStruct((md, 128), jnp.float32),   # plp cols [0,groups) + ld
        ),
        in_specs=[
            pl.BlockSpec(memory_space=pltpu.MemorySpace.VMEM),   # x_dense
            pl.BlockSpec(memory_space=pltpu.MemorySpace.VMEM),   # x0_dense
            pl.BlockSpec(memory_space=pltpu.MemorySpace.VMEM),   # params (2, K)
        ],
        out_specs=(
            pl.BlockSpec(memory_space=pltpu.MemorySpace.VMEM),
            pl.BlockSpec(memory_space=pltpu.MemorySpace.VMEM),
        ),
    )(x_dense, x0_dense, params)

    z = z_dense.reshape(m, n)
    prior_logprob = packed[:, :groups].reshape(m)
    log_det = jnp.broadcast_to(packed[0, groups], (m,))   # zeros(m) + sum_k ld_k
    return z, prior_logprob, log_det


def normalizing_flow_forward(x, obser, x0_stack, log_alpha_stack, beta_stack):
    """Forward of NormalizingFlowModel_cond with K radial flows and a standard
    MVN prior.  Returns (z, prior_logprob, log_det) like the PyTorch module.

    `obser` is accepted for signature parity only — the Radial flow in lgssm.py
    does not condition on it.
    """
    del obser  # TODO(synk): thread `obser` through if a flow actually conditions on it.
    x0_dense, params = prepare_flow_params(x0_stack, log_alpha_stack, beta_stack,
                                           x.shape[1])
    return _flow_forward_dense(x, x0_dense, params)


def normalizing_flow_reference(x, obser, x0_stack, log_alpha_stack, beta_stack):
    """Pure-JAX reference mirroring the PyTorch forward() literally: x is NOT
    rebound inside the flow loop; z is the last flow's output."""
    del obser
    m, n = x.shape
    ld = jnp.zeros((m,), jnp.float32)
    z = x
    for k in range(x0_stack.shape[0]):
        diff = x - x0_stack[k][None, :]              # original x for every flow
        r = jnp.sqrt(jnp.sum(diff * diff))
        ea = jnp.exp(log_alpha_stack[k])
        be = jnp.log(1.0 + jnp.exp(beta_stack[k])) - ea
        h = 1.0 / (ea + r)
        z = x + be * h * diff                        # only the last one survives
        ld = ld + (n - 1) * jnp.log(1.0 + be * h) + jnp.log(
            1.0 + be * h - be * r / (ea + r) ** 2)
    prior_logprob = -0.5 * (n * _LOG_2PI + jnp.sum(z * z, axis=-1))
    return z, prior_logprob, ld


if __name__ == "__main__":
    # Small shapes consistent with the module: m particles, n = dim, K flows.
    m, dim, num_flows, obs_dim = 64, 32, 4, 32
    key = jax.random.PRNGKey(0)
    k_x, k_obs, k_x0, k_la, k_b = jax.random.split(key, 5)

    x = jax.random.normal(k_x, (m, dim), dtype=jnp.float32)
    obser = jax.random.normal(k_obs, (obs_dim,), dtype=jnp.float32)   # unused by Radial

    # reset_parameters-style init: U(-sqrt(1/dim), sqrt(1/dim)).
    bound = math.sqrt(1.0 / dim)
    x0_stack = jax.random.uniform(k_x0, (num_flows, dim), minval=-bound, maxval=bound,
                                  dtype=jnp.float32)
    log_alpha_stack = jax.random.uniform(k_la, (num_flows,), minval=-bound, maxval=bound,
                                         dtype=jnp.float32)
    beta_stack = jax.random.uniform(k_b, (num_flows,), minval=-bound, maxval=bound,
                                    dtype=jnp.float32)

    z, prior_logprob, log_det = normalizing_flow_forward(
        x, obser, x0_stack, log_alpha_stack, beta_stack)
    jax.block_until_ready((z, prior_logprob, log_det))

    z_ref, plp_ref, ld_ref = normalizing_flow_reference(
        x, obser, x0_stack, log_alpha_stack, beta_stack)
    np.testing.assert_allclose(np.asarray(z), np.asarray(z_ref), rtol=1e-4, atol=1e-4)
    np.testing.assert_allclose(np.asarray(prior_logprob), np.asarray(plp_ref),
                               rtol=1e-4, atol=1e-4)
    np.testing.assert_allclose(np.asarray(log_det), np.asarray(ld_ref),
                               rtol=1e-4, atol=1e-4)

    print("KERNEL_OK")
</pallas_src>

<mosaic_0001>
module attributes {stable_mosaic.version = 11 : i64} {
  func.func @_nf_radial_stack_kernel(%arg0: memref<16x128xf32, #tpu.memory_space<vmem>>, %arg1: memref<4x128xf32, #tpu.memory_space<vmem>>, %arg2: memref<2x4xf32, #tpu.memory_space<vmem>>, %arg3: memref<16x128xf32, #tpu.memory_space<vmem>>, %arg4: memref<16x128xf32, #tpu.memory_space<vmem>>) attributes {dimension_semantics = [], scalar_prefetch = 0 : i64, scratch_operands = 0 : i64, tpu.core_type = #tpu.core_type<tc>} {
    %c0 = arith.constant 0 : index
    %c0_0 = arith.constant 0 : index
    %0 = vector.load %arg0[%c0, %c0_0] : memref<16x128xf32, #tpu.memory_space<vmem>>, vector<16x128xf32>
    %c0_1 = arith.constant 0 : index
    %c0_2 = arith.constant 0 : index
    %1 = vector.load %arg2[%c0_1, %c0_2] : memref<2x4xf32, #tpu.memory_space<vmem>>, vector<1x4xf32>
    %c1 = arith.constant 1 : index
    %c0_3 = arith.constant 0 : index
    %2 = vector.load %arg2[%c1, %c0_3] : memref<2x4xf32, #tpu.memory_space<vmem>>, vector<1x4xf32>
    %3 = math.exp %1 : vector<1x4xf32>
    %cst = arith.constant 0.000000e+00 : f32
    %4 = vector.broadcast %cst : f32 to vector<1x4xf32>
    %5 = arith.maximumf %2, %4 : vector<1x4xf32>
    %6 = math.absf %2 : vector<1x4xf32>
    %cst_4 = arith.constant 0.000000e+00 : f32
    %7 = vector.broadcast %cst_4 : f32 to vector<1x4xf32>
    %8 = arith.subf %7, %6 : vector<1x4xf32>
    %9 = math.exp %8 : vector<1x4xf32>
    %cst_5 = arith.constant 1.000000e+00 : f32
    %10 = vector.broadcast %cst_5 : f32 to vector<1x4xf32>
    %11 = arith.addf %10, %9 : vector<1x4xf32>
    %12 = math.log %11 : vector<1x4xf32>
    %13 = arith.addf %5, %12 : vector<1x4xf32>
    %14 = arith.subf %13, %3 : vector<1x4xf32>
    %cst_6 = arith.constant 1.000000e+00 : f32
    %15 = vector.broadcast %cst_6 : f32 to vector<1x1xf32>
    %cst_7 = arith.constant 1.000000e+00 : f32
    %16 = vector.broadcast %cst_7 : f32 to vector<1x1xf32>
    %c0_8 = arith.constant 0 : index
    %c0_9 = arith.constant 0 : index
    %17 = vector.load %arg1[%c0_8, %c0_9] : memref<4x128xf32, #tpu.memory_space<vmem>>, vector<1x128xf32>
    %18 = vector.broadcast %17 : vector<1x128xf32> to vector<16x128xf32>
    %19 = arith.subf %0, %18 : vector<16x128xf32>
    %20 = arith.mulf %19, %19 : vector<16x128xf32>
    %21 = vector.shape_cast %20 : vector<16x128xf32> to vector<1x16x128xf32>
    %cst_10 = arith.constant dense<0.000000e+00> : vector<1xf32>
    %22 = vector.multi_reduction <add>, %21, %cst_10 [1, 2] : vector<1x16x128xf32> to vector<1xf32>
    %23 = vector.shape_cast %22 : vector<1xf32> to vector<1x1x1xf32>
    %24 = vector.extract %23[0, 0, 0] : f32 from vector<1x1x1xf32>
    %25 = vector.broadcast %24 : f32 to vector<1x1xf32>
    %26 = math.sqrt %25 : vector<1x1xf32>
    %27 = vector.extract_strided_slice %3 {offsets = [0, 0], sizes = [1, 1], strides = [1, 1]} : vector<1x4xf32> to vector<1x1xf32>
    %28 = vector.extract_strided_slice %14 {offsets = [0, 0], sizes = [1, 1], strides = [1, 1]} : vector<1x4xf32> to vector<1x1xf32>
    %29 = arith.addf %27, %26 : vector<1x1xf32>
    %cst_11 = arith.constant 1.000000e+00 : f32
    %30 = vector.broadcast %cst_11 : f32 to vector<1x1xf32>
    %31 = arith.divf %30, %29 : vector<1x1xf32>
    %32 = arith.mulf %28, %31 : vector<1x1xf32>
    %cst_12 = arith.constant 1.000000e+00 : f32
    %33 = vector.broadcast %cst_12 : f32 to vector<1x1xf32>
    %34 = arith.addf %33, %32 : vector<1x1xf32>
    %35 = arith.mulf %15, %34 : vector<1x1xf32>
    %cst_13 = arith.constant 1.000000e+00 : f32
    %36 = vector.broadcast %cst_13 : f32 to vector<1x1xf32>
    %37 = arith.addf %36, %32 : vector<1x1xf32>
    %38 = arith.mulf %28, %26 : vector<1x1xf32>
    %39 = arith.mulf %38, %31 : vector<1x1xf32>
    %40 = arith.mulf %39, %31 : vector<1x1xf32>
    %41 = arith.subf %37, %40 : vector<1x1xf32>
    %42 = arith.mulf %16, %41 : vector<1x1xf32>
    %c1_14 = arith.constant 1 : index
    %c0_15 = arith.constant 0 : index
    %43 = vector.load %arg1[%c1_14, %c0_15] : memref<4x128xf32, #tpu.memory_space<vmem>>, vector<1x128xf32>
    %44 = vector.broadcast %43 : vector<1x128xf32> to vector<16x128xf32>
    %45 = arith.subf %0, %44 : vector<16x128xf32>
    %46 = arith.mulf %45, %45 : vector<16x128xf32>
    %47 = vector.shape_cast %46 : vector<16x128xf32> to vector<1x16x128xf32>
    %cst_16 = arith.constant dense<0.000000e+00> : vector<1xf32>
    %48 = vector.multi_reduction <add>, %47, %cst_16 [1, 2] : vector<1x16x128xf32> to vector<1xf32>
    %49 = vector.shape_cast %48 : vector<1xf32> to vector<1x1x1xf32>
    %50 = vector.extract %49[0, 0, 0] : f32 from vector<1x1x1xf32>
    %51 = vector.broadcast %50 : f32 to vector<1x1xf32>
    %52 = math.sqrt %51 : vector<1x1xf32>
    %53 = vector.extract_strided_slice %3 {offsets = [0, 1], sizes = [1, 1], strides = [1, 1]} : vector<1x4xf32> to vector<1x1xf32>
    %54 = vector.extract_strided_slice %14 {offsets = [0, 1], sizes = [1, 1], strides = [1, 1]} : vector<1x4xf32> to vector<1x1xf32>
    %55 = arith.addf %53, %52 : vector<1x1xf32>
    %cst_17 = arith.constant 1.000000e+00 : f32
    %56 = vector.broadcast %cst_17 : f32 to vector<1x1xf32>
    %57 = arith.divf %56, %55 : vector<1x1xf32>
    %58 = arith.mulf %54, %57 : vector<1x1xf32>
    %cst_18 = arith.constant 1.000000e+00 : f32
    %59 = vector.broadcast %cst_18 : f32 to vector<1x1xf32>
    %60 = arith.addf %59, %58 : vector<1x1xf32>
    %61 = arith.mulf %35, %60 : vector<1x1xf32>
    %cst_19 = arith.constant 1.000000e+00 : f32
    %62 = vector.broadcast %cst_19 : f32 to vector<1x1xf32>
    %63 = arith.addf %62, %58 : vector<1x1xf32>
    %64 = arith.mulf %54, %52 : vector<1x1xf32>
    %65 = arith.mulf %64, %57 : vector<1x1xf32>
    %66 = arith.mulf %65, %57 : vector<1x1xf32>
    %67 = arith.subf %63, %66 : vector<1x1xf32>
    %68 = arith.mulf %42, %67 : vector<1x1xf32>
    %c2 = arith.constant 2 : index
    %c0_20 = arith.constant 0 : index
    %69 = vector.load %arg1[%c2, %c0_20] : memref<4x128xf32, #tpu.memory_space<vmem>>, vector<1x128xf32>
    %70 = vector.broadcast %69 : vector<1x128xf32> to vector<16x128xf32>
    %71 = arith.subf %0, %70 : vector<16x128xf32>
    %72 = arith.mulf %71, %71 : vector<16x128xf32>
    %73 = vector.shape_cast %72 : vector<16x128xf32> to vector<1x16x128xf32>
    %cst_21 = arith.constant dense<0.000000e+00> : vector<1xf32>
    %74 = vector.multi_reduction <add>, %73, %cst_21 [1, 2] : vector<1x16x128xf32> to vector<1xf32>
    %75 = vector.shape_cast %74 : vector<1xf32> to vector<1x1x1xf32>
    %76 = vector.extract %75[0, 0, 0] : f32 from vector<1x1x1xf32>
    %77 = vector.broadcast %76 : f32 to vector<1x1xf32>
    %78 = math.sqrt %77 : vector<1x1xf32>
    %79 = vector.extract_strided_slice %3 {offsets = [0, 2], sizes = [1, 1], strides = [1, 1]} : vector<1x4xf32> to vector<1x1xf32>
    %80 = vector.extract_strided_slice %14 {offsets = [0, 2], sizes = [1, 1], strides = [1, 1]} : vector<1x4xf32> to vector<1x1xf32>
    %81 = arith.addf %79, %78 : vector<1x1xf32>
    %cst_22 = arith.constant 1.000000e+00 : f32
    %82 = vector.broadcast %cst_22 : f32 to vector<1x1xf32>
    %83 = arith.divf %82, %81 : vector<1x1xf32>
    %84 = arith.mulf %80, %83 : vector<1x1xf32>
    %cst_23 = arith.constant 1.000000e+00 : f32
    %85 = vector.broadcast %cst_23 : f32 to vector<1x1xf32>
    %86 = arith.addf %85, %84 : vector<1x1xf32>
    %87 = arith.mulf %61, %86 : vector<1x1xf32>
    %cst_24 = arith.constant 1.000000e+00 : f32
    %88 = vector.broadcast %cst_24 : f32 to vector<1x1xf32>
    %89 = arith.addf %88, %84 : vector<1x1xf32>
    %90 = arith.mulf %80, %78 : vector<1x1xf32>
    %91 = arith.mulf %90, %83 : vector<1x1xf32>
    %92 = arith.mulf %91, %83 : vector<1x1xf32>
    %93 = arith.subf %89, %92 : vector<1x1xf32>
    %94 = arith.mulf %68, %93 : vector<1x1xf32>
    %c3 = arith.constant 3 : index
    %c0_25 = arith.constant 0 : index
    %95 = vector.load %arg1[%c3, %c0_25] : memref<4x128xf32, #tpu.memory_space<vmem>>, vector<1x128xf32>
    %96 = vector.broadcast %95 : vector<1x128xf32> to vector<16x128xf32>
    %97 = arith.subf %0, %96 : vector<16x128xf32>
    %98 = arith.mulf %97, %97 : vector<16x128xf32>
    %99 = vector.shape_cast %98 : vector<16x128xf32> to vector<1x16x128xf32>
    %cst_26 = arith.constant dense<0.000000e+00> : vector<1xf32>
    %100 = vector.multi_reduction <add>, %99, %cst_26 [1, 2] : vector<1x16x128xf32> to vector<1xf32>
    %101 = vector.shape_cast %100 : vector<1xf32> to vector<1x1x1xf32>
    %102 = vector.extract %101[0, 0, 0] : f32 from vector<1x1x1xf32>
    %103 = vector.broadcast %102 : f32 to vector<1x1xf32>
    %104 = math.sqrt %103 : vector<1x1xf32>
    %105 = vector.extract_strided_slice %3 {offsets = [0, 3], sizes = [1, 1], strides = [1, 1]} : vector<1x4xf32> to vector<1x1xf32>
    %106 = vector.extract_strided_slice %14 {offsets = [0, 3], sizes = [1, 1], strides = [1, 1]} : vector<1x4xf32> to vector<1x1xf32>
    %107 = arith.addf %105, %104 : vector<1x1xf32>
    %cst_27 = arith.constant 1.000000e+00 : f32
    %108 = vector.broadcast %cst_27 : f32 to vector<1x1xf32>
    %109 = arith.divf %108, %107 : vector<1x1xf32>
    %110 = arith.mulf %106, %109 : vector<1x1xf32>
    %cst_28 = arith.constant 1.000000e+00 : f32
    %111 = vector.broadcast %cst_28 : f32 to vector<1x1xf32>
    %112 = arith.addf %111, %110 : vector<1x1xf32>
    %113 = arith.mulf %87, %112 : vector<1x1xf32>
    %cst_29 = arith.constant 1.000000e+00 : f32
    %114 = vector.broadcast %cst_29 : f32 to vector<1x1xf32>
    %115 = arith.addf %114, %110 : vector<1x1xf32>
    %116 = arith.mulf %106, %104 : vector<1x1xf32>
    %117 = arith.mulf %116, %109 : vector<1x1xf32>
    %118 = arith.mulf %117, %109 : vector<1x1xf32>
    %119 = arith.subf %115, %118 : vector<1x1xf32>
    %120 = arith.mulf %94, %119 : vector<1x1xf32>
    %121 = vector.broadcast %110 : vector<1x1xf32> to vector<16x128xf32>
    %122 = arith.mulf %121, %97 : vector<16x128xf32>
    %123 = arith.addf %0, %122 : vector<16x128xf32>
    %c0_30 = arith.constant 0 : index
    %c0_31 = arith.constant 0 : index
    %124 = vector.load %arg3[%c0_30, %c0_31] : memref<16x128xf32, #tpu.memory_space<vmem>>, vector<16x128xf32>
    tpu.vector_store %arg3[%c0_30, %c0_31], %123 {strides = array<i32>} : memref<16x128xf32, #tpu.memory_space<vmem>>, vector<16x128xf32>,
    %125 = math.log %113 : vector<1x1xf32>
    %cst_32 = arith.constant 3.100000e+01 : f32
    %126 = vector.broadcast %cst_32 : f32 to vector<1x1xf32>
    %127 = arith.mulf %126, %125 : vector<1x1xf32>
    %128 = math.log %120 : vector<1x1xf32>
    %129 = arith.addf %127, %128 : vector<1x1xf32>
    %130 = tpu.iota {dimensions = array<i32: 0>} : vector<128x128xi32>
    %131 = tpu.iota {dimensions = array<i32: 1>} : vector<128x128xi32>
    %c32_i32 = arith.constant 32 : i32
    %132 = vector.broadcast %c32_i32 : i32 to vector<128x128xi32>
    %133 = arith.muli %131, %132 : vector<128x128xi32>
    %134 = arith.subi %130, %133 : vector<128x128xi32>
    %c0_i32 = arith.constant 0 : i32
    %135 = vector.broadcast %c0_i32 : i32 to vector<128x128xi32>
    %136 = arith.cmpi sge, %134, %135 : vector<128x128xi32>
    %c32_i32_33 = arith.constant 32 : i32
    %137 = vector.broadcast %c32_i32_33 : i32 to vector<128x128xi32>
    %138 = arith.cmpi slt, %134, %137 : vector<128x128xi32>
    %139 = arith.andi %136, %138 : vector<128x128xi1>
    %140 = arith.extui %139 : vector<128x128xi1> to vector<128x128xi32>
    %141 = arith.sitofp %140 : vector<128x128xi32> to vector<128x128xf32>
    %142 = arith.mulf %123, %123 : vector<16x128xf32>
    %cst_34 = arith.constant dense<0.000000e+00> : vector<16x128xf32>
    %143 = tpu.matmul %142, %141, %cst_34 {dimension_numbers = #tpu.dot_dimension_numbers<[1], [0], [0], [1], [0, 0, 1, 1], [], []>} : vector<16x128xf32>, vector<128x128xf32>, vector<16x128xf32> -> vector<16x128xf32>
    %cst_35 = arith.constant 58.8120651 : f32
    %144 = vector.broadcast %cst_35 : f32 to vector<16x128xf32>
    %145 = arith.addf %144, %143 : vector<16x128xf32>
    %cst_36 = arith.constant -5.000000e-01 : f32
    %146 = vector.broadcast %cst_36 : f32 to vector<16x128xf32>
    %147 = arith.mulf %146, %145 : vector<16x128xf32>
    %148 = tpu.iota {dimensions = array<i32: 1>} : vector<16x128xi32>
    %c4_i32 = arith.constant 4 : i32
    %149 = vector.broadcast %c4_i32 : i32 to vector<16x128xi32>
    %150 = arith.cmpi slt, %148, %149 : vector<16x128xi32>
    %151 = vector.shape_cast %129 : vector<1x1xf32> to vector<1x1xf32>
    %152 = vector.broadcast %151 : vector<1x1xf32> to vector<16x128xf32>
    %153 = arith.select %150, %147, %152 : vector<16x128xi1>, vector<16x128xf32>
    %c0_37 = arith.constant 0 : index
    %c0_38 = arith.constant 0 : index
    %154 = vector.load %arg4[%c0_37, %c0_38] : memref<16x128xf32, #tpu.memory_space<vmem>>, vector<16x128xf32>
    tpu.vector_store %arg4[%c0_37, %c0_38], %153 {strides = array<i32>} : memref<16x128xf32, #tpu.memory_space<vmem>>, vector<16x128xf32>,
    return
  }
}

</mosaic_0001>

<llo_original>
// kernel: _flow_forward_dense.1
$region0: #{_flow_forward_dense.1}
  #allocation0 [shape = 'u32[]', space=smem, size = 0x4, offset = 0x4, fixed_abs, tag = 'smem constant byte address 0x4 - core index']
  #allocation1 [shape = 'u32[144,128]{1,0:T(1,128)}', space=vmem, size = 0x12000, scoped, tag = 'internal scratch']
  %s0 = inlined_call_operand.vmem [shape: f32[16,128], index: 0, kind: input, shape index: {}]
  %s1 = inlined_call_operand.vmem [shape: f32[4,128], index: 1, kind: input, shape index: {}]
  %s2 = inlined_call_operand.vmem [shape: f32[2,4], index: 2, kind: input, shape index: {}]
  %s3 = inlined_call_operand.vmem [shape: f32[16,128], index: 3, kind: output, shape index: {0}]
  %s4 = inlined_call_operand.vmem [shape: f32[16,128], index: 4, kind: output, shape index: {1}]
  %5 = xla_tuple %s3, %s4
  %s6 = sld [smem:[#allocation0]]
  $region30: #{_flow_forward_dense.1} parent=0
    _
  %s8 = ssub.s32 1, %s6
  %s9 = scalar_select 0, %s8, %s6
  // Predicated region
  $region2: #{_flow_forward_dense.1} parent=0 // pred_check
    _
  $region3: #{_flow_forward_dense.1} parent=0 // pred_check_branch
    %11 = sbr.rel (0) target = $region5
  $region4: #{_flow_forward_dense.1} parent=0 // pred_region
    _
  $region5: #{_flow_forward_dense.1} parent=0 // pred_fallthru
    _
  // Predicated region
  $region6: #{_flow_forward_dense.1} parent=0 // pred_check
    _
  $region7: #{_flow_forward_dense.1} parent=0 // pred_check_branch
    %13 = sbr.rel (0) target = $region9
  $region8: #{_flow_forward_dense.1} parent=0 // pred_region
    _
  $region9: #{_flow_forward_dense.1} parent=0 // pred_fallthru
    _
  // Predicated region
  $region10: #{_flow_forward_dense.1} parent=0 // pred_check
    _
  $region11: #{_flow_forward_dense.1} parent=0 // pred_check_branch
    %15 = sbr.rel (0) target = $region13
  $region12: #{_flow_forward_dense.1} parent=0 // pred_region
    _
  $region13: #{_flow_forward_dense.1} parent=0 // pred_fallthru
    _
  %v16 = vld [vmem:[%s0] sm:$0xff]
  %v17 = vld [vmem:[%s0 + $0x8] sm:$0xff]
  %v18 = vld [vmem:[%s2] sm:$0x1]
  %v19 = vld [vmem:[%s2 + $0x1] sm:$0x1]
  %v20 = vmul.f32 %v18, 1.442695
  %v21 = vpow.pop %v20
  %v22 = vmax.f32 %v19, 0.0
  %v23 = vand.u32 2147483647, %v19
  %v24 = vsub.f32 0.0, %v23
  %v25 = vmul.f32 %v24, 1.442695
  %v26 = vpow.pop %v25
  %v27 = vadd.f32 %v26, 1.0
  %v28 = vlog2.pop %v27
  %v29 = vmul.f32 %v28, 0.6931472
  %v30 = vadd.f32 %v22, %v29
  %v31 = vsub.f32 %v30, %v21
  %v32 = vld [vmem:[%s1] sm:$0x1]
  %v33 = vlaneseq
  %v34 = vshrl.u32 %v33, 7
  %v35 = vsub.s32 0, %v34
  %v36 = vrot.slane %v32, %v35
  %v37 = vsub.f32 %v16, %v36
  %v38 = vsub.f32 %v17, %v36
  %v39 = vmul.f32 %v37, %v37
  %v40 = vmul.f32 %v38, %v38
  %v41 = vadd.f32 %v39, %v40
  %42 = vadd.xlane.f32.xlu0 %v41
  %v43 = vpop.xlane.xlu0 %42
  %v44 = vrot.slane %v43, 4
  %v45 = vadd.f32 %v43, %v44
  %v46 = vrot.slane %v45, 2
  %v47 = vadd.f32 %v45, %v46
  %v48 = vrot.slane %v47, 1
  %v49 = vadd.f32 %v47, %v48
  %s50 = vtos %v49
  %v51 = vstv %s50
  %v52 = vrsqrt.pop %v51
  %v53 = vmul.f32 %v51, %v52
  %vm54 = vcmp.eq.f32.partialorder %v51, inf
  %v55 = vsel %vm54, %v51, %v53
  %vm56 = vcmp.eq.f32.partialorder %v51, 0.0
  %v57 = vand.u32 %v51, 2147483648
  %v58 = vsel %vm56, %v57, %v55
  %v59 = vadd.f32 %v21, %v58
  %v60 = vrcp.pop %v59
  %v61 = vmul.f32 1.0, %v60
  %v62 = vmul.f32 %v31, %v61
  %v63 = vadd.f32 %v62, 1.0
  %v64 = vmul.f32 %v31, %v58
  %v65 = vmul.f32 %v64, %v61
  %v66 = vmul.f32 %v65, %v61
  %v67 = vsub.f32 %v63, %v66
  %v68 = vld [vmem:[%s1 + $0x1] sm:$0x1]
  %v69 = vlaneseq
  %v70 = vshrl.u32 %v69, 7
  %v71 = vsub.s32 0, %v70
  %v72 = vrot.slane %v68, %v71
  %v73 = vsub.f32 %v16, %v72
  %v74 = vsub.f32 %v17, %v72
  %v75 = vmul.f32 %v73, %v73
  %v76 = vmul.f32 %v74, %v74
  %v77 = vadd.f32 %v75, %v76
  %78 = vadd.xlane.f32.xlu0 %v77
  %v79 = vpop.xlane.xlu0 %78
  %v80 = vrot.slane %v79, 4
  %v81 = vadd.f32 %v79, %v80
  %v82 = vrot.slane %v81, 2
  %v83 = vadd.f32 %v81, %v82
  %v84 = vrot.slane %v83, 1
  %v85 = vadd.f32 %v83, %v84
  %s86 = vtos %v85
  %v87 = vstv %s86
  %v88 = vrsqrt.pop %v87
  %v89 = vmul.f32 %v87, %v88
  %vm90 = vcmp.eq.f32.partialorder %v87, inf
  %v91 = vsel %vm90, %v87, %v89
  %vm92 = vcmp.eq.f32.partialorder %v87, 0.0
  %v93 = vand.u32 %v87, 2147483648
  %v94 = vsel %vm92, %v93, %v91
  %v95 = vadd.f32 %v21, %v94
  %v96 = vrcp.pop %v95
  %v97 = vmul.f32 1.0, %v96
  %v98 = vmul.f32 %v31, %v97
  %v99 = vadd.f32 %v98, 1.0
  %101 = vrot.lane.b32.xlu0 %v99, 127
  %v102 = vpop.permute.xlu0 %101
  %v104 = vmul.f32 %v63, %v102
  %v105 = vmul.f32 %v31, %v94
  %v106 = vmul.f32 %v105, %v97
  %v107 = vmul.f32 %v106, %v97
  %v108 = vsub.f32 %v99, %v107
  %110 = vrot.lane.b32.xlu0 %v108, 127
  %v111 = vpop.permute.xlu0 %110
  %v113 = vmul.f32 %v67, %v111
  %v114 = vld [vmem:[%s1 + $0x2] sm:$0x1]
  %v115 = vlaneseq
  %v116 = vshrl.u32 %v115, 7
  %v117 = vsub.s32 0, %v116
  %v118 = vrot.slane %v114, %v117
  %v119 = vsub.f32 %v16, %v118
  %v120 = vsub.f32 %v17, %v118
  %v121 = vmul.f32 %v119, %v119
  %v122 = vmul.f32 %v120, %v120
  %v123 = vadd.f32 %v121, %v122
  %124 = vadd.xlane.f32.xlu0 %v123
  %v125 = vpop.xlane.xlu0 %124
  %v126 = vrot.slane %v125, 4
  %v127 = vadd.f32 %v125, %v126
  %v128 = vrot.slane %v127, 2
  %v129 = vadd.f32 %v127, %v128
  %v130 = vrot.slane %v129, 1
  %v131 = vadd.f32 %v129, %v130
  %s132 = vtos %v131
  %v133 = vstv %s132
  %v134 = vrsqrt.pop %v133
  %v135 = vmul.f32 %v133, %v134
  %vm136 = vcmp.eq.f32.partialorder %v133, inf
  %v137 = vsel %vm136, %v133, %v135
  %vm138 = vcmp.eq.f32.partialorder %v133, 0.0
  %v139 = vand.u32 %v133, 2147483648
  %v140 = vsel %vm138, %v139, %v137
  %v141 = vadd.f32 %v21, %v140
  %v142 = vrcp.pop %v141
  %v143 = vmul.f32 1.0, %v142
  %v144 = vmul.f32 %v31, %v143
  %v145 = vadd.f32 %v144, 1.0
  %147 = vrot.lane.b32.xlu0 %v145, 126
  %v148 = vpop.permute.xlu0 %147
  %v150 = vmul.f32 %v104, %v148
  %v151 = vmul.f32 %v31, %v140
  %v152 = vmul.f32 %v151, %v143
  %v153 = vmul.f32 %v152, %v143
  %v154 = vsub.f32 %v145, %v153
  %156 = vrot.lane.b32.xlu0 %v154, 126
  %v157 = vpop.permute.xlu0 %156
  %v159 = vmul.f32 %v113, %v157
  %v160 = vld [vmem:[%s1 + $0x3] sm:$0x1]
  %v161 = vlaneseq
  %v162 = vshrl.u32 %v161, 7
  %v163 = vsub.s32 0, %v162
  %v164 = vrot.slane %v160, %v163
  %v165 = vsub.f32 %v16, %v164
  %v166 = vsub.f32 %v17, %v164
  %v167 = vmul.f32 %v165, %v165
  %v168 = vmul.f32 %v166, %v166
  %v169 = vadd.f32 %v167, %v168
  %170 = vadd.xlane.f32.xlu0 %v169
  %v171 = vpop.xlane.xlu0 %170
  %v172 = vrot.slane %v171, 4
  %v173 = vadd.f32 %v171, %v172
  %v174 = vrot.slane %v173, 2
  %v175 = vadd.f32 %v173, %v174
  %v176 = vrot.slane %v175, 1
  %v177 = vadd.f32 %v175, %v176
  %s178 = vtos %v177
  %v179 = vstv %s178
  %v180 = vrsqrt.pop %v179
  %v181 = vmul.f32 %v179, %v180
  %vm182 = vcmp.eq.f32.partialorder %v179, inf
  %v183 = vsel %vm182, %v179, %v181
  %vm184 = vcmp.eq.f32.partialorder %v179, 0.0
  %v185 = vand.u32 %v179, 2147483648
  %v186 = vsel %vm184, %v185, %v183
  %v187 = vadd.f32 %v21, %v186
  %v188 = vrcp.pop %v187
  %v189 = vmul.f32 1.0, %v188
  %v190 = vmul.f32 %v31, %v189
  %v191 = vadd.f32 %v190, 1.0
  %193 = vrot.lane.b32.xlu0 %v191, 125
  %v194 = vpop.permute.xlu0 %193
  %v196 = vmul.f32 %v150, %v194
  %v197 = vmul.f32 %v31, %v186
  %v198 = vmul.f32 %v197, %v189
  %v199 = vmul.f32 %v198, %v189
  %v200 = vsub.f32 %v191, %v199
  %202 = vrot.lane.b32.xlu0 %v200, 125
  %v203 = vpop.permute.xlu0 %202
  %v205 = vmul.f32 %v159, %v203
  %207 = vrot.lane.b32.xlu0 %v190, 125
  %v208 = vpop.permute.xlu0 %207
  %s209 = vtos %v208
  %v210 = vstv %s209
  %v212 = vmul.f32 %v210, %v165
  %v213 = vmul.f32 %v210, %v166
  %v214 = vadd.f32 %v16, %v212
  %v215 = vadd.f32 %v17, %v213
  %216 = vst [vmem:[%s3] sm:$0xff] %v214
  %217 = vst [vmem:[%s3 + $0x8] sm:$0xff] %v215
  %v218 = vlog2.pop %v196
  %v219 = vmul.f32 %v218, 0.6931472
  %v220 = vmul.f32 %v219, 31.0
  %v221 = vlog2.pop %v205
  %v222 = vmul.f32 %v221, 0.6931472
  %v223 = vadd.f32 %v220, %v222
  %v224 = vlaneseq
  %v225 = vshrl.u32 %v224, 7
  %v226 = vadd.s32 %v225, 8
  %v227 = vadd.s32 %v225, 16
  %v228 = vadd.s32 %v225, 24
  %v229 = vadd.s32 %v225, 32
  %v230 = vadd.s32 %v225, 40
  %v231 = vadd.s32 %v225, 48
  %v232 = vadd.s32 %v225, 56
  %v233 = vadd.s32 %v225, 64
  %v234 = vadd.s32 %v225, 72
  %v235 = vadd.s32 %v225, 80
  %v236 = vadd.s32 %v225, 88
  %v237 = vadd.s32 %v225, 96
  %v238 = vadd.s32 %v225, 104
  %v239 = vadd.s32 %v225, 112
  %v240 = vadd.s32 %v225, 120
  %v241 = vlaneseq
  %v242 = vand.u32 %v241, 127
  %v243 = vmul.u32 %v242, 32
  %v244 = vsub.s32 %v225, %v243
  %v245 = vsub.s32 %v226, %v243
  %v246 = vsub.s32 %v227, %v243
  %v247 = vsub.s32 %v228, %v243
  %v248 = vsub.s32 %v229, %v243
  %v249 = vsub.s32 %v230, %v243
  %v250 = vsub.s32 %v231, %v243
  %v251 = vsub.s32 %v232, %v243
  %v252 = vsub.s32 %v233, %v243
  %v253 = vsub.s32 %v234, %v243
  %v254 = vsub.s32 %v235, %v243
  %v255 = vsub.s32 %v236, %v243
  %v256 = vsub.s32 %v237, %v243
  %v257 = vsub.s32 %v238, %v243
  %v258 = vsub.s32 %v239, %v243
  %v259 = vsub.s32 %v240, %v243
  %vm260 = vcmp.ge.s32.totalorder %v244, 0
  %vm261 = vcmp.ge.s32.totalorder %v245, 0
  %vm262 = vcmp.ge.s32.totalorder %v246, 0
  %vm263 = vcmp.ge.s32.totalorder %v247, 0
  %vm264 = vcmp.ge.s32.totalorder %v248, 0
  %vm265 = vcmp.ge.s32.totalorder %v249, 0
  %vm266 = vcmp.ge.s32.totalorder %v250, 0
  %vm267 = vcmp.ge.s32.totalorder %v251, 0
  %vm268 = vcmp.ge.s32.totalorder %v252, 0
  %vm269 = vcmp.ge.s32.totalorder %v253, 0
  %vm270 = vcmp.ge.s32.totalorder %v254, 0
  %vm271 = vcmp.ge.s32.totalorder %v255, 0
  %vm272 = vcmp.ge.s32.totalorder %v256, 0
  %vm273 = vcmp.ge.s32.totalorder %v257, 0
  %vm274 = vcmp.ge.s32.totalorder %v258, 0
  %vm275 = vcmp.ge.s32.totalorder %v259, 0
  %vm276 = vcmp.lt.s32.totalorder %v244, 32
  %vm277 = vcmp.lt.s32.totalorder %v245, 32
  %vm278 = vcmp.lt.s32.totalorder %v246, 32
  %vm279 = vcmp.lt.s32.totalorder %v247, 32
  %vm280 = vcmp.lt.s32.totalorder %v248, 32
  %vm281 = vcmp.lt.s32.totalorder %v249, 32
  %vm282 = vcmp.lt.s32.totalorder %v250, 32
  %vm283 = vcmp.lt.s32.totalorder %v251, 32
  %vm284 = vcmp.lt.s32.totalorder %v252, 32
  %vm285 = vcmp.lt.s32.totalorder %v253, 32
  %vm286 = vcmp.lt.s32.totalorder %v254, 32
  %vm287 = vcmp.lt.s32.totalorder %v255, 32
  %vm288 = vcmp.lt.s32.totalorder %v256, 32
  %vm289 = vcmp.lt.s32.totalorder %v257, 32
  %vm290 = vcmp.lt.s32.totalorder %v258, 32
  %vm291 = vcmp.lt.s32.totalorder %v259, 32
  %vm292 = vmand %vm260, %vm276
  %vm293 = vmand %vm261, %vm277
  %vm294 = vmand %vm262, %vm278
  %vm295 = vmand %vm263, %vm279
  %vm296 = vmand %vm264, %vm280
  %vm297 = vmand %vm265, %vm281
  %vm298 = vmand %vm266, %vm282
  %vm299 = vmand %vm267, %vm283
  %vm300 = vmand %vm268, %vm284
  %vm301 = vmand %vm269, %vm285
  %vm302 = vmand %vm270, %vm286
  %vm303 = vmand %vm271, %vm287
  %vm304 = vmand %vm272, %vm288
  %vm305 = vmand %vm273, %vm289
  %vm306 = vmand %vm274, %vm290
  %vm307 = vmand %vm275, %vm291
  %v308 = vsel %vm292, 1, 0
  %v309 = vsel %vm293, 1, 0
  %v310 = vsel %vm294, 1, 0
  %v311 = vsel %vm295, 1, 0
  %v312 = vsel %vm296, 1, 0
  %v313 = vsel %vm297, 1, 0
  %v314 = vsel %vm298, 1, 0
  %v315 = vsel %vm299, 1, 0
  %v316 = vsel %vm300, 1, 0
  %v317 = vsel %vm301, 1, 0
  %v318 = vsel %vm302, 1, 0
  %v319 = vsel %vm303, 1, 0
  %v320 = vsel %vm304, 1, 0
  %v321 = vsel %vm305, 1, 0
  %v322 = vsel %vm306, 1, 0
  %v323 = vsel %vm307, 1, 0
  %v324 = vcvt.s32.f32 %v308
  %v325 = vcvt.s32.f32 %v309
  %v326 = vcvt.s32.f32 %v310
  %v327 = vcvt.s32.f32 %v311
  %v328 = vcvt.s32.f32 %v312
  %v329 = vcvt.s32.f32 %v313
  %v330 = vcvt.s32.f32 %v314
  %v331 = vcvt.s32.f32 %v315
  %v332 = vcvt.s32.f32 %v316
  %v333 = vcvt.s32.f32 %v317
  %v334 = vcvt.s32.f32 %v318
  %v335 = vcvt.s32.f32 %v319
  %v336 = vcvt.s32.f32 %v320
  %v337 = vcvt.s32.f32 %v321
  %v338 = vcvt.s32.f32 %v322
  %v339 = vcvt.s32.f32 %v323
  %v340 = vmul.f32 %v214, %v214
  %v341 = vmul.f32 %v215, %v215
  %342 = vmatprep.subr.mxu0 0.0
  %343 = vmatpush1.msra.mxu0 %v339
  %344 = vmatprep.subr.mxu0 0.0
  %345 = vmatpush1.msra.mxu0 %v338
  %346 = vmatprep.subr.mxu0 0.0
  %347 = vmatpush1.msra.mxu0 %v337
  %348 = vmatprep.subr.mxu0 0.0
  %349 = vmatpush1.msra.mxu0 %v336
  %350 = vmatprep.subr.mxu0 0.0
  %351 = vmatpush1.msra.mxu0 %v335
  %352 = vmatprep.subr.mxu0 0.0
  %353 = vmatpush1.msra.mxu0 %v334
  %354 = vmatprep.subr.mxu0 0.0
  %355 = vmatpush1.msra.mxu0 %v333
  %356 = vmatprep.subr.mxu0 0.0
  %357 = vmatpush1.msra.mxu0 %v332
  %358 = vmatprep.subr.mxu0 0.0
  %359 = vmatpush1.msra.mxu0 %v331
  %360 = vmatprep.subr.mxu0 0.0
  %361 = vmatpush1.msra.mxu0 %v330
  %362 = vmatprep.subr.mxu0 0.0
  %363 = vmatpush1.msra.mxu0 %v329
  %364 = vmatprep.subr.mxu0 0.0
  %365 = vmatpush1.msra.mxu0 %v328
  %366 = vmatprep.subr.mxu0 0.0
  %367 = vmatpush1.msra.mxu0 %v327
  %368 = vmatprep.subr.mxu0 0.0
  %369 = vmatpush1.msra.mxu0 %v326
  %370 = vmatprep.subr.mxu0 0.0
  %371 = vmatpush1.msra.mxu0 %v325
  %372 = vmatprep.subr.mxu0 0.0
  %373 = vmatpush1.msra.mxu0 %v324
  %374 = vmatprep.subr.mxu0 0.0
  %375 = vmatpush2.msra.mxu0 0.0
  %376 = vmatprep.subr.mxu0 0.0
  %377 = vmatpush2.msra.mxu0 0.0
  %378 = vmatprep.subr.mxu0 0.0
  %379 = vmatpush2.msra.mxu0 0.0
  %380 = vmatprep.subr.mxu0 0.0
  %381 = vmatpush2.msra.mxu0 0.0
  %382 = vmatprep.subr.mxu0 0.0
  %383 = vmatpush2.msra.mxu0 0.0
  %384 = vmatprep.subr.mxu0 0.0
  %385 = vmatpush2.msra.mxu0 0.0
  %386 = vmatprep.subr.mxu0 0.0
  %387 = vmatpush2.msra.mxu0 0.0
  %388 = vmatprep.subr.mxu0 0.0
  %389 = vmatpush2.msra.mxu0 0.0
  %390 = vmatprep.subr.mxu0 0.0
  %391 = vmatpush2.msra.mxu0 0.0
  %392 = vmatprep.subr.mxu0 0.0
  %393 = vmatpush2.msra.mxu0 0.0
  %394 = vmatprep.subr.mxu0 0.0
  %395 = vmatpush2.msra.mxu0 0.0
  %396 = vmatprep.subr.mxu0 0.0
  %397 = vmatpush2.msra.mxu0 0.0
  %398 = vmatprep.subr.mxu0 0.0
  %399 = vmatpush2.msra.mxu0 0.0
  %400 = vmatprep.subr.mxu0 0.0
  %401 = vmatpush2.msra.mxu0 0.0
  %402 = vmatprep.subr.mxu0 0.0
  %403 = vmatpush2.msra.mxu0 0.0
  %404 = vmatprep.subr.mxu0 0.0
  %405 = vmatpush2.msra.mxu0 0.0
  %406 = vmatprep.mubr.f32.mxu0 0.0
  %407 = vmatmul.mubr.f32.gmra.mxu0 %v340
  %v408 = vpop.f32.mrf.mxu0
  %v409 = vadd.f32 58.812065, %v408
  %v410 = vpop.f32.mrf.mxu0
  %411 = vmatprep.mubr.f32.mxu0 0.0
  %412 = vmatmul.mubr.f32.gmra.mxu0 %v341
  %v413 = vpop.f32.mrf.mxu0
  %v414 = vadd.f32 58.812065, %v413
  %v415 = vpop.f32.mrf.mxu0
  %416 = vdwg.mxu0
  %v417 = vmul.f32 %v409, -0.5
  %v418 = vmul.f32 %v414, -0.5
  %vm419 = vcmp.lt.s32.totalorder %v242, 4
  %s421 = vtos %v223
  %v422 = vstv %s421
  %v424 = vsel %vm419, %v417, %v422
  %v425 = vsel %vm419, %v418, %v422
  %426 = vst [vmem:[%s4] sm:$0xff] %v424
  %427 = vst [vmem:[%s4 + $0x8] sm:$0xff] %v425
  // Predicated region
  $region14: #{_flow_forward_dense.1} parent=0 // pred_check
    _
  $region15: #{_flow_forward_dense.1} parent=0 // pred_check_branch
    %429 = sbr.rel (0) target = $region17
  $region16: #{_flow_forward_dense.1} parent=0 // pred_region
    _
  $region17: #{_flow_forward_dense.1} parent=0 // pred_fallthru
    _
  // Predicated region
  $region18: #{_flow_forward_dense.1} parent=0 // pred_check
    _
  $region19: #{_flow_forward_dense.1} parent=0 // pred_check_branch
    %431 = sbr.rel (0) target = $region21
  $region20: #{_flow_forward_dense.1} parent=0 // pred_region
    _
  $region21: #{_flow_forward_dense.1} parent=0 // pred_fallthru
    _
  // Predicated region
  $region22: #{_flow_forward_dense.1} parent=0 // pred_check
    _
  $region23: #{_flow_forward_dense.1} parent=0 // pred_check_branch
    %433 = sbr.rel (0) target = $region25
  $region24: #{_flow_forward_dense.1} parent=0 // pred_region
    _
  $region25: #{_flow_forward_dense.1} parent=0 // pred_fallthru
    _
  // Predicated region
  $region26: #{_flow_forward_dense.1} parent=0 // pred_check
    _
  $region27: #{_flow_forward_dense.1} parent=0 // pred_check_branch
    %435 = sbr.rel (0) target = $region29
  $region28: #{_flow_forward_dense.1} parent=0 // pred_region
    _
  $region29: #{_flow_forward_dense.1} parent=0 // pred_fallthru
    _

</llo_original>
